<compile_context>
chip_gen: v6e
topology: v6e:2x2x1
jax: 0.10.0
libtpu: 0.0.40
codegen_flags: <defaults>
</compile_context>

<pallas_src>
import jax
import jax.numpy as jnp
from jax.experimental import pallas as pl
from jax.experimental.pallas import tpu as pltpu


def _round_up(x, m):
    return ((x + m - 1) // m) * m


def _gemm_bn_swish_kernel(p_ref, w_ref, shift_ref, o_ref, acc_ref):
    """One (TM, TN) output tile of  swish(patches @ w_scaled + shift).

    p_ref:     (TM, TK)  im2col patch tile                 VMEM
    w_ref:     (TK, TN)  BN-scale-folded weight tile       VMEM
    shift_ref: (1,  TN)  BN shift = beta - mean*scale      VMEM
    o_ref:     (TM, TN)  output tile                       VMEM
    acc_ref:   (TM, TN)  f32 accumulator                   VMEM scratch
    """
    k = pl.program_id(2)

    @pl.when(k == 0)
    def _():
        acc_ref[...] = jnp.zeros_like(acc_ref)

    acc_ref[...] += jnp.dot(p_ref[...], w_ref[...],
                            preferred_element_type=jnp.float32)

    @pl.when(k == pl.num_programs(2) - 1)
    def _():
        z = acc_ref[...] + shift_ref[...]               # BN affine (scale folded into W)
        o_ref[...] = (z * jax.nn.sigmoid(z)).astype(o_ref.dtype)   # Swish


def conv_bn_layer(x_nchw, conv_weight_oihw, bn_gamma, bn_beta, bn_mean, bn_var,
                  *, stride=1, padding=0, eps=1e-5):
    """Matches ConvBNLayer.forward (groups=1, act='swish', eval-mode BN). NCHW io."""
    n, c_in, h, w = x_nchw.shape
    c_out, _, kh, kw = conv_weight_oihw.shape

    # ---- Fold BatchNorm (running stats) into per-channel scale/shift ----
    scale = (bn_gamma / jnp.sqrt(bn_var + eps)).astype(jnp.float32)
    shift = (bn_beta - bn_mean * scale).astype(jnp.float32)

    # ---- Layout glue: NCHW -> NHWC, OIHW -> HWIO, fold scale into weights ----
    x_nhwc = jnp.transpose(x_nchw, (0, 2, 3, 1))
    if padding > 0:
        x_nhwc = jnp.pad(x_nhwc, ((0, 0), (padding, padding), (padding, padding), (0, 0)))
        h, w = h + 2 * padding, w + 2 * padding
    h_out = (h - kh) // stride + 1
    w_out = (w - kw) // stride + 1

    w_hwio = jnp.transpose(conv_weight_oihw, (2, 3, 1, 0)).astype(jnp.float32)
    w_hwio = (w_hwio * scale[None, None, None, :]).astype(x_nchw.dtype)

    # ---- im2col (wrapper-side data rearrangement): (N, H_out, W_out, KH*KW*Cin) ----
    # Tap ordering over the last axis is (kh, kw, c_in), matching w_hwio.reshape below.
    taps = []
    for i in range(kh):
        for j in range(kw):
            taps.append(x_nhwc[:, i:i + stride * (h_out - 1) + 1:stride,
                                  j:j + stride * (w_out - 1) + 1:stride, :])
    patches = jnp.concatenate(taps, axis=-1)

    m = n * h_out * w_out
    k_dim = kh * kw * c_in
    p_mat = patches.reshape(m, k_dim)
    w_mat = w_hwio.reshape(k_dim, c_out)

    # ---- Tile sizes & zero padding (lane-dense output: C_out -> multiple of 128) ----
    tm = min(256, _round_up(m, 8))
    tn = 128
    tk = min(512, _round_up(k_dim, 8))

    m_pad = _round_up(m, tm)
    k_pad = _round_up(k_dim, tk)
    n_pad = _round_up(c_out, tn)

    p_mat = jnp.pad(p_mat, ((0, m_pad - m), (0, k_pad - k_dim)))
    w_mat = jnp.pad(w_mat, ((0, k_pad - k_dim), (0, n_pad - c_out)))
    shift_p = jnp.pad(shift, ((0, n_pad - c_out),)).reshape(1, n_pad)

    grid = (m_pad // tm, n_pad // tn, k_pad // tk)

    itemsize = jnp.dtype(x_nchw.dtype).itemsize
    cost = pl.CostEstimate(
        flops=2 * m * k_dim * c_out,
        transcendentals=m * c_out,
        bytes_accessed=(p_mat.size * itemsize + w_mat.size * itemsize
                        + m_pad * n_pad * itemsize),
    )

    out = pl.pallas_call(
        _gemm_bn_swish_kernel,
        out_shape=jax.ShapeDtypeStruct((m_pad, n_pad), x_nchw.dtype),
        grid_spec=pltpu.PrefetchScalarGridSpec(
            num_scalar_prefetch=0,
            grid=grid,
            in_specs=[
                pl.BlockSpec((tm, tk), lambda mi, ni, ki: (mi, ki)),
                pl.BlockSpec((tk, tn), lambda mi, ni, ki: (ki, ni)),
                pl.BlockSpec((1, tn), lambda mi, ni, ki: (0, ni)),
            ],
            out_specs=pl.BlockSpec((tm, tn), lambda mi, ni, ki: (mi, ni)),
            scratch_shapes=[pltpu.VMEM((tm, tn), jnp.float32)],
        ),
        compiler_params=pltpu.CompilerParams(
            dimension_semantics=("parallel", "parallel", "arbitrary"),
            vmem_limit_bytes=32 * 1024 * 1024,
        ),
        cost_estimate=cost,
    )(p_mat, w_mat, shift_p)

    # ---- Slice off padding, restore NCHW ----
    y = out[:m, :c_out].reshape(n, h_out, w_out, c_out)
    return jnp.transpose(y, (0, 3, 1, 2))


if __name__ == "__main__":
    # Small shapes consistent with the module: ch_in=4, ch_out=8, 3x3, stride 1, pad 0.
    N, C_IN, H, W = 2, 4, 16, 16
    C_OUT, K = 8, 3

    key = jax.random.PRNGKey(0)
    kx, kw_, kg, kb, km, kv = jax.random.split(key, 6)

    x = jax.random.normal(kx, (N, C_IN, H, W), dtype=jnp.float32)
    conv_w = jax.random.normal(kw_, (C_OUT, C_IN, K, K), dtype=jnp.float32) * 0.1
    bn_gamma = jax.random.uniform(kg, (C_OUT,), minval=0.5, maxval=1.5)
    bn_beta = jax.random.normal(kb, (C_OUT,)) * 0.1
    bn_mean = jax.random.normal(km, (C_OUT,)) * 0.1
    bn_var = jax.random.uniform(kv, (C_OUT,), minval=0.5, maxval=1.5)

    y = conv_bn_layer(x, conv_w, bn_gamma, bn_beta, bn_mean, bn_var,
                      stride=1, padding=0, eps=1e-5)
    y = jax.block_until_ready(y)

    # Pure-JAX reference (eval-mode ConvBNLayer forward).
    ref_conv = jax.lax.conv_general_dilated(
        x, conv_w, window_strides=(1, 1), padding="VALID",
        dimension_numbers=("NCHW", "OIHW", "NCHW"))
    ref_scale = (bn_gamma / jnp.sqrt(bn_var + 1e-5)).reshape(1, C_OUT, 1, 1)
    ref_shift = (bn_beta - bn_mean * (bn_gamma / jnp.sqrt(bn_var + 1e-5))).reshape(1, C_OUT, 1, 1)
    ref = ref_conv * ref_scale + ref_shift
    ref = ref * jax.nn.sigmoid(ref)

    assert y.shape == (N, C_OUT, H - K + 1, W - K + 1)
    assert jnp.max(jnp.abs(y - ref)) < 1e-3

    print("KERNEL_OK")
</pallas_src>

<mosaic_0001>
module attributes {stable_mosaic.version = 11 : i64} {
  func.func @_gemm_bn_swish_kernel(%arg0: i32, %arg1: i32, %arg2: i32, %arg3: memref<256x40xf32, #tpu.memory_space<vmem>>, %arg4: memref<40x128xf32, #tpu.memory_space<vmem>>, %arg5: memref<1x128xf32, #tpu.memory_space<vmem>>, %arg6: memref<256x128xf32, #tpu.memory_space<vmem>>, %arg7: memref<256x128xf32, #tpu.memory_space<vmem>>) attributes {dimension_semantics = [#tpu.dimension_semantics<parallel>, #tpu.dimension_semantics<parallel>, #tpu.dimension_semantics<arbitrary>], iteration_bounds = array<i64: 2, 1, 1>, scalar_prefetch = 0 : i64, scratch_operands = 1 : i64, tpu.core_type = #tpu.core_type<tc>, window_params = [{transform_indices = @transform_0, window_bounds = array<i64: 256, 40>}, {transform_indices = @transform_1, window_bounds = array<i64: 40, 128>}, {transform_indices = @transform_2, window_bounds = array<i64: 1, 128>}, {transform_indices = @transform_3, window_bounds = array<i64: 256, 128>}]} {
    %c0_i32 = arith.constant 0 : i32
    %0 = arith.cmpi eq, %arg2, %c0_i32 : i32
    %1 = arith.extui %0 : i1 to i32
    %c0_i32_0 = arith.constant 0 : i32
    %2 = arith.cmpi ne, %1, %c0_i32_0 : i32
    scf.if %2 {
      %cst_10 = arith.constant 0.000000e+00 : f32
      %12 = vector.broadcast %cst_10 : f32 to vector<256x128xf32>
      %c0_11 = arith.constant 0 : index
      %c0_12 = arith.constant 0 : index
      %13 = vector.load %arg7[%c0_11, %c0_12] : memref<256x128xf32, #tpu.memory_space<vmem>>, vector<256x128xf32>
      tpu.vector_store %arg7[%c0_11, %c0_12], %12 {strides = array<i32>} : memref<256x128xf32, #tpu.memory_space<vmem>>, vector<256x128xf32>,
    } else {
    }
    %c0 = arith.constant 0 : index
    %c0_1 = arith.constant 0 : index
    %3 = vector.load %arg7[%c0, %c0_1] : memref<256x128xf32, #tpu.memory_space<vmem>>, vector<256x128xf32>
    %c0_2 = arith.constant 0 : index
    %c0_3 = arith.constant 0 : index
    %4 = vector.load %arg3[%c0_2, %c0_3] : memref<256x40xf32, #tpu.memory_space<vmem>>, vector<256x40xf32>
    %c0_4 = arith.constant 0 : index
    %c0_5 = arith.constant 0 : index
    %5 = vector.load %arg4[%c0_4, %c0_5] : memref<40x128xf32, #tpu.memory_space<vmem>>, vector<40x128xf32>
    %cst = arith.constant dense<0.000000e+00> : vector<256x128xf32>
    %6 = tpu.matmul %4, %5, %cst {dimension_numbers = #tpu.dot_dimension_numbers<[1], [0], [0], [1], [0, 0, 1, 1], [], []>} : vector<256x40xf32>, vector<40x128xf32>, vector<256x128xf32> -> vector<256x128xf32>
    %7 = arith.addf %3, %6 : vector<256x128xf32>
    %c0_6 = arith.constant 0 : index
    %c0_7 = arith.constant 0 : index
    %8 = vector.load %arg7[%c0_6, %c0_7] : memref<256x128xf32, #tpu.memory_space<vmem>>, vector<256x128xf32>
    tpu.vector_store %arg7[%c0_6, %c0_7], %7 {strides = array<i32>} : memref<256x128xf32, #tpu.memory_space<vmem>>, vector<256x128xf32>,
    %c0_i32_8 = arith.constant 0 : i32
    %9 = arith.cmpi eq, %arg2, %c0_i32_8 : i32
    %10 = arith.extui %9 : i1 to i32
    %c0_i32_9 = arith.constant 0 : i32
    %11 = arith.cmpi ne, %10, %c0_i32_9 : i32
    scf.if %11 {
      %c0_10 = arith.constant 0 : index
      %c0_11 = arith.constant 0 : index
      %12 = vector.load %arg7[%c0_10, %c0_11] : memref<256x128xf32, #tpu.memory_space<vmem>>, vector<256x128xf32>
      %c0_12 = arith.constant 0 : index
      %c0_13 = arith.constant 0 : index
      %13 = vector.load %arg5[%c0_12, %c0_13] : memref<1x128xf32, #tpu.memory_space<vmem>>, vector<1x128xf32>
      %14 = vector.broadcast %13 : vector<1x128xf32> to vector<256x128xf32>
      %15 = arith.addf %12, %14 : vector<256x128xf32>
      %16 = arith.negf %15 : vector<256x128xf32>
      %17 = math.exp %16 : vector<256x128xf32>
      %cst_14 = arith.constant 1.000000e+00 : f32
      %18 = vector.broadcast %cst_14 : f32 to vector<256x128xf32>
      %19 = arith.addf %18, %17 : vector<256x128xf32>
      %20 = arith.divf %18, %19 : vector<256x128xf32>
      %21 = arith.mulf %15, %20 : vector<256x128xf32>
      %c0_15 = arith.constant 0 : index
      %c0_16 = arith.constant 0 : index
      %22 = vector.load %arg6[%c0_15, %c0_16] : memref<256x128xf32, #tpu.memory_space<vmem>>, vector<256x128xf32>
      tpu.vector_store %arg6[%c0_15, %c0_16], %21 {strides = array<i32>} : memref<256x128xf32, #tpu.memory_space<vmem>>, vector<256x128xf32>,
    } else {
    }
    return
  }
  func.func @transform_0(%arg0: i32, %arg1: i32, %arg2: i32) -> (i32, i32) {
    %c0_i32 = arith.constant 0 : i32
    return %arg0, %arg2 : i32, i32
  }
  func.func @transform_1(%arg0: i32, %arg1: i32, %arg2: i32) -> (i32, i32) {
    %c0_i32 = arith.constant 0 : i32
    return %arg2, %arg1 : i32, i32
  }
  func.func @transform_2(%arg0: i32, %arg1: i32, %arg2: i32) -> (i32, i32) {
    %c0_i32 = arith.constant 0 : i32
    %c0_i32_0 = arith.constant 0 : i32
    return %c0_i32, %arg1 : i32, i32
  }
  func.func @transform_3(%arg0: i32, %arg1: i32, %arg2: i32) -> (i32, i32) {
    %c0_i32 = arith.constant 0 : i32
    return %arg0, %arg1 : i32, i32
  }
}

</mosaic_0001>

<llo_original>
// kernel: tpu_custom_call.1
$region0: #{tpu_custom_call.1}
  #allocation0 [shape = 'u32[]', space=smem, size = 0x4, offset = 0x4, fixed_abs, tag = 'smem constant byte address 0x4 - core index']
  #allocation1 [shape = 'u32[144,128]{1,0:T(1,128)}', space=vmem, size = 0x12000, scoped, tag = 'internal scratch']
  #allocation2 [shape = 'f32[256,128]{1,0:T(8,128)}', space=vmem, size = 0x20000, scoped, tag = 'scratch operand']
  %s0 = inlined_call_operand.vmem [shape: f32[512,40], index: 0, kind: input, shape index: {}]
  %s1 = inlined_call_operand.vmem [shape: f32[40,128], index: 1, kind: input, shape index: {}]
  %s2 = inlined_call_operand.vmem [shape: f32[1,128], index: 2, kind: input, shape index: {}]
  %s3 = inlined_call_operand.hbm [shape: f32[512,128], index: 3, kind: output, shape index: {}]
  %s4 = sld [smem:[#allocation0]]
  $region53: #{tpu_custom_call.1} parent=0
    _
  %s6 = ssub.s32 1, %s4
  %s7 = scalar_select 0, %s6, %s4
  $region1: #{tpu_custom_call.1} parent=0
    #allocation3 [shape = 'u8[262144]{0}', space=vmem, size = 0x40000, scoped, tag = 'output window, operand 0']
    #allocation4 [shape = 's32[2]{0}', space=sflag, size = 0x8, scoped, tag = 'scoped memory for tpu_custom_call.1']
    %8 = vsyncpa [#allocation4], 0
    %s9 = scalar_lea.sflag [#allocation4], 1
    %10 = vsyncpa %s9, 0
    loop: start=0, step=1, limit=4
    $region2: #{tpu_custom_call.1} parent=1 // loop_pre_header
      _
    $region3: #{tpu_custom_call.1} parent=1 // loop_header
      %s12 = sphi 0, %s16
      %p13 = scmp.ge.s32.totalorder %s12, 4
      %s19 = sphi 0, %s38
      %s20 = sphi 0, %s34
      %s21 = sphi 0, %s30
      %s22 = sphi 0, %s19
      %s23 = sphi 0, %s20
      %s24 = sphi 0, %s21
      %s25 = sphi 0, %s22
      %s26 = sphi 0, %s23
      %s27 = sphi 0, %s24
      %s43 = sphi 0, %s45
      %s46 = sphi 0, %s43
      %s47 = sphi 0, %s46
      %s63 = sphi 0, %s47
      %s71 = sphi 0, %s73
      %s74 = sphi 0, %s71
      %s75 = sphi 0, %s74
      %s91 = sphi 0, %s75
      %s97 = sphi 0, %s99
      %s100 = sphi 0, %s97
      %s101 = sphi 0, %s100
      %s117 = sphi 0, %s101
      %s125 = sphi 0, %s127
      %s128 = sphi 0, %s125
      %s129 = sphi 0, %s128
      %s145 = sphi 0, %s129
    $region4: #{tpu_custom_call.1} parent=1 // loop_header_branch
      %15 = sbr.rel (%p13) target = $region8
    $region5: #{tpu_custom_call.1} parent=1 // loop_body
      %s17 = ssub.s32 %s12, 1
      %s18 = ssub.s32 %s12, 2
      %s28 = sadd.s32 1, %s21
      %p29 = scmp.ge.s32.totalorder %s28, 1
      %s30 = scalar_select %p29, 0, %s28
      %s31 = sadd.s32 1, %s20
      %s32 = scalar_select %p29, %s31, %s20
      %p33 = scmp.ge.s32.totalorder %s32, 1
      %s34 = scalar_select %p33, 0, %s32
      %s35 = sadd.s32 1, %s19
      %s36 = scalar_select %p33, %s35, %s19
      %p37 = scmp.ge.s32.totalorder %s36, 2
      %s38 = scalar_select %p37, 0, %s36
      %s39 = ssub.s32 %s19, %s38
      %s40 = ssub.s32 %s21, %s30
      %s41 = sor.u32 %s39, %s40
      %p42 = scmp.eq.s32.totalorder %s41, 0
      %s44 = sadd.s32 %s43, 1
      %s45 = scalar_select %p42, %s43, %s44
      %p48 = pneg %p42
      %p49 = scmp.eq.s32.totalorder %s12, 1
      %p50 = por %p48, %p49
      %p51 = scmp.ne.s32.totalorder %s43, %s46
      %p52 = scmp.eq.s32.totalorder %s12, 0
      %p53 = por %p51, %p52
      %p54 = scmp.ne.s32.totalorder %s43, %s46
      %p55 = scmp.eq.s32.totalorder %s17, 1
      %p56 = por %p54, %p55
      %p57 = scmp.ne.s32.totalorder %s46, %s47
      %p58 = scmp.eq.s32.totalorder %s17, 0
      %p59 = por %p57, %p58
      %p60 = scmp.ne.s32.totalorder %s46, %s47
      %p61 = scmp.eq.s32.totalorder %s18, 1
      %p62 = por %p60, %p61
      %p64 = scmp.ne.s32.totalorder %s47, %s63
      %p65 = scmp.eq.s32.totalorder %s18, 0
      %p66 = por %p64, %p65
      %s67 = ssub.s32 %s21, %s30
      %s68 = ssub.s32 %s20, %s34
      %s69 = sor.u32 %s67, %s68
      %p70 = scmp.eq.s32.totalorder %s69, 0
      %s72 = sadd.s32 %s71, 1
      %s73 = scalar_select %p70, %s71, %s72
      %p76 = pneg %p70
      %p77 = scmp.eq.s32.totalorder %s12, 1
      %p78 = por %p76, %p77
      %p79 = scmp.ne.s32.totalorder %s71, %s74
      %p80 = scmp.eq.s32.totalorder %s12, 0
      %p81 = por %p79, %p80
      %p82 = scmp.ne.s32.totalorder %s71, %s74
      %p83 = scmp.eq.s32.totalorder %s17, 1
      %p84 = por %p82, %p83
      %p85 = scmp.ne.s32.totalorder %s74, %s75
      %p86 = scmp.eq.s32.totalorder %s17, 0
      %p87 = por %p85, %p86
      %p88 = scmp.ne.s32.totalorder %s74, %s75
      %p89 = scmp.eq.s32.totalorder %s18, 1
      %p90 = por %p88, %p89
      %p92 = scmp.ne.s32.totalorder %s75, %s91
      %p93 = scmp.eq.s32.totalorder %s18, 0
      %p94 = por %p92, %p93
      %s95 = ssub.s32 %s20, %s34
      %p96 = scmp.eq.s32.totalorder %s95, 0
      %s98 = sadd.s32 %s97, 1
      %s99 = scalar_select %p96, %s97, %s98
      %p102 = pneg %p96
      %p103 = scmp.eq.s32.totalorder %s12, 1
      %p104 = por %p102, %p103
      %p105 = scmp.ne.s32.totalorder %s97, %s100
      %p106 = scmp.eq.s32.totalorder %s12, 0
      %p107 = por %p105, %p106
      %p108 = scmp.ne.s32.totalorder %s97, %s100
      %p109 = scmp.eq.s32.totalorder %s17, 1
      %p110 = por %p108, %p109
      %p111 = scmp.ne.s32.totalorder %s100, %s101
      %p112 = scmp.eq.s32.totalorder %s17, 0
      %p113 = por %p111, %p112
      %p114 = scmp.ne.s32.totalorder %s100, %s101
      %p115 = scmp.eq.s32.totalorder %s18, 1
      %p116 = por %p114, %p115
      %p118 = scmp.ne.s32.totalorder %s101, %s117
      %p119 = scmp.eq.s32.totalorder %s18, 0
      %p120 = por %p118, %p119
      %s121 = ssub.s32 %s19, %s38
      %s122 = ssub.s32 %s20, %s34
      %s123 = sor.u32 %s121, %s122
      %p124 = scmp.eq.s32.totalorder %s123, 0
      %s126 = sadd.s32 %s125, 1
      %s127 = scalar_select %p124, %s125, %s126
      %p130 = pneg %p124
      %p131 = scmp.eq.s32.totalorder %s12, 1
      %p132 = por %p130, %p131
      %p133 = scmp.ne.s32.totalorder %s125, %s128
      %p134 = scmp.eq.s32.totalorder %s12, 0
      %p135 = por %p133, %p134
      %p136 = scmp.ne.s32.totalorder %s125, %s128
      %p137 = scmp.eq.s32.totalorder %s17, 1
      %p138 = por %p136, %p137
      %p139 = scmp.ne.s32.totalorder %s128, %s129
      %p140 = scmp.eq.s32.totalorder %s17, 0
      %p141 = por %p139, %p140
      %p142 = scmp.ne.s32.totalorder %s128, %s129
      %p143 = scmp.eq.s32.totalorder %s18, 1
      %p144 = por %p142, %p143
      %p146 = scmp.ne.s32.totalorder %s129, %s145
      %p147 = scmp.eq.s32.totalorder %s18, 0
      %p148 = por %p146, %p147
      %p149 = scmp.le.s32.totalorder 1, %s12
      %p150 = scmp.lt.s32.totalorder %s12, 3
      %p151 = pnand %p149, %p150
      %p152 = pneg %p151
      // Predicated region
      $region9: #{tpu_custom_call.1} parent=5 // pred_check
        _
      $region10: #{tpu_custom_call.1} parent=5 // pred_check_branch
        %154 = sbr.rel (%p151) target = $region12
      $region11: #{tpu_custom_call.1} parent=5 // pred_region
        %s155 = ssub.s32 %s12, 1
        // Predicated region
        $region13: #{tpu_custom_call.1} parent=11 // pred_check
          %p156 = pneg %p87
        $region14: #{tpu_custom_call.1} parent=11 // pred_check_branch
          %158 = sbr.rel (%p156) target = $region16
        $region15: #{tpu_custom_call.1} parent=11 // pred_region
          %s159 = smul.u32 5, %s24
          %p160 = scmp.lt.s32.totalorder %s159, 4
          %s161 = scalar_select %p160, %s159, 4
          %p162 = scmp.lt.s32.totalorder %s23, 0
          %s163 = scalar_select %p162, %s23, 0
          %s164 = sadd.s32 %s163, %s161
          %s165 = smul.addr %s164, 8
          %s166 = scalar_lea.vmem %s1, %s165
          %s167 = smul.u32 5, %s24
        $region16: #{tpu_custom_call.1} parent=11 // pred_fallthru
          _
        // Predicated region
        $region17: #{tpu_custom_call.1} parent=11 // pred_check
          %p168 = pneg %p113
        $region18: #{tpu_custom_call.1} parent=11 // pred_check_branch
          %170 = sbr.rel (%p168) target = $region20
        $region19: #{tpu_custom_call.1} parent=11 // pred_region
          %p171 = scmp.lt.s32.totalorder %s23, 0
          %s172 = scalar_select %p171, %s23, 0
          %s173 = scalar_lea.vmem %s2, %s172
        $region20: #{tpu_custom_call.1} parent=11 // pred_fallthru
          _
      $region12: #{tpu_custom_call.1} parent=5 // pred_fallthru
        _
      %p174 = scmp.lt.s32.totalorder %s12, 2
      // Predicated region
      $region21: #{tpu_custom_call.1} parent=5 // pred_check
        %p175 = pneg %p174
      $region22: #{tpu_custom_call.1} parent=5 // pred_check_branch
        %177 = sbr.rel (%p175) target = $region24
      $region23: #{tpu_custom_call.1} parent=5 // pred_region
        // Predicated region
        $region25: #{tpu_custom_call.1} parent=23 // pred_check
          %p178 = pneg %p53
        $region26: #{tpu_custom_call.1} parent=23 // pred_check_branch
          %180 = sbr.rel (%p178) target = $region28
        $region27: #{tpu_custom_call.1} parent=23 // pred_region
          %s181 = smul.u32 32, %s19
          %p182 = scmp.lt.s32.totalorder %s181, 63
          %s183 = scalar_select %p182, %s181, 63
          %p184 = scmp.lt.s32.totalorder %s21, 0
          %s185 = scalar_select %p184, %s21, 0
          %s186 = sadd.s32 %s185, %s183
          %s187 = smul.addr %s186, 8
          %s188 = scalar_lea.vmem %s0, %s187
          %s189 = smul.u32 32, %s19
        $region28: #{tpu_custom_call.1} parent=23 // pred_fallthru
          _
      $region24: #{tpu_custom_call.1} parent=5 // pred_fallthru
        _
      %p190 = scmp.le.s32.totalorder 1, %s12
      %p191 = scmp.lt.s32.totalorder %s12, 3
      %p192 = pnand %p190, %p191
      %p193 = pneg %p192
      // Predicated region
      $region29: #{tpu_custom_call.1} parent=5 // pred_check
        _
      $region30: #{tpu_custom_call.1} parent=5 // pred_check_branch
        %195 = sbr.rel (%p192) target = $region32
      $region31: #{tpu_custom_call.1} parent=5 // pred_region
        %s196 = ssub.s32 %s12, 1
        %s197 = smul.u32 32, %s22
        %p198 = scmp.lt.s32.totalorder %s197, 63
        %s199 = scalar_select %p198, %s197, 63
        %p200 = scmp.lt.s32.totalorder %s24, 0
        %s201 = scalar_select %p200, %s24, 0
        %s202 = sadd.s32 %s201, %s199
        %s203 = smul.addr %s202, 8
        %s204 = scalar_lea.vmem %s0, %s203
        %p205 = pneg %p59
        %p206 = pneg %p56
        %s207 = smul.u32 5, %s24
        %p208 = scmp.lt.s32.totalorder %s207, 4
        %s209 = scalar_select %p208, %s207, 4
        %p210 = scmp.lt.s32.totalorder %s23, 0
        %s211 = scalar_select %p210, %s23, 0
        %s212 = sadd.s32 %s211, %s209
        %s213 = smul.addr %s212, 8
        %s214 = scalar_lea.vmem %s1, %s213
        %p215 = pneg %p87
        %p216 = pneg %p84
        %p217 = scmp.lt.s32.totalorder %s23, 0
        %s218 = scalar_select %p217, %s23, 0
        %s219 = scalar_lea.vmem %s2, %s218
        %p220 = pneg %p113
        %p221 = pneg %p110
        %p222 = pneg %p141
        %p223 = pneg %p138
        %s224 = sand.u32 %s128, 1
        %s225 = scalar_lea.sflag [#allocation4], %s224
        %s226 = sand.u32 %s128, 1
        %s227 = smul.addr %s226, 256
        %s228 = scalar_lea.vmem [#allocation3], %s227
        %s229 = smul.u32 32, %s22
        %p230 = scmp.lt.s32.totalorder %s229, 63
        %s231 = scalar_select %p230, %s229, 63
        %p232 = scmp.lt.s32.totalorder %s24, 0
        %s233 = scalar_select %p232, %s24, 0
        %s234 = sadd.s32 %s233, %s231
        %s235 = smul.addr %s234, 8
        %s236 = scalar_lea.vmem %s0, %s235
        %s237 = smul.u32 32, %s22
        %s238 = smul.u32 5, %s24
        %p239 = scmp.lt.s32.totalorder %s238, 4
        %s240 = scalar_select %p239, %s238, 4
        %p241 = scmp.lt.s32.totalorder %s23, 0
        %s242 = scalar_select %p241, %s23, 0
        %s243 = sadd.s32 %s242, %s240
        %s244 = smul.addr %s243, 8
        %s245 = scalar_lea.vmem %s1, %s244
        %s246 = smul.u32 5, %s24
        %p247 = scmp.lt.s32.totalorder %s23, 0
        %s248 = scalar_select %p247, %s23, 0
        %s249 = scalar_lea.vmem %s2, %s248
        %s250 = smul.u32 32, %s22
        %p251 = scmp.eq.s32.totalorder %s24, 0
        // Predicated region
        $region33: #{tpu_custom_call.1} parent=31 // pred_check
          %p252 = pneg %p251
        $region34: #{tpu_custom_call.1} parent=31 // pred_check_branch
          %254 = sbr.rel (%p252) target = $region36
        $region35: #{tpu_custom_call.1} parent=31 // pred_region
          %255 = vst [vmem:[#allocation2] sm:$0xff] 0.0
          %256 = vst [vmem:[#allocation2 + $0x8] sm:$0xff] 0.0
          %257 = vst [vmem:[#allocation2 + $0x10] sm:$0xff] 0.0
          %258 = vst [vmem:[#allocation2 + $0x18] sm:$0xff] 0.0
          %259 = vst [vmem:[#allocation2 + $0x20] sm:$0xff] 0.0
          %260 = vst [vmem:[#allocation2 + $0x28] sm:$0xff] 0.0
          %261 = vst [vmem:[#allocation2 + $0x30] sm:$0xff] 0.0
          %262 = vst [vmem:[#allocation2 + $0x38] sm:$0xff] 0.0
          %263 = vst [vmem:[#allocation2 + $0x40] sm:$0xff] 0.0
          %264 = vst [vmem:[#allocation2 + $0x48] sm:$0xff] 0.0
          %265 = vst [vmem:[#allocation2 + $0x50] sm:$0xff] 0.0
          %266 = vst [vmem:[#allocation2 + $0x58] sm:$0xff] 0.0
          %267 = vst [vmem:[#allocation2 + $0x60] sm:$0xff] 0.0
          %268 = vst [vmem:[#allocation2 + $0x68] sm:$0xff] 0.0
          %269 = vst [vmem:[#allocation2 + $0x70] sm:$0xff] 0.0
          %270 = vst [vmem:[#allocation2 + $0x78] sm:$0xff] 0.0
          %271 = vst [vmem:[#allocation2 + $0x80] sm:$0xff] 0.0
          %272 = vst [vmem:[#allocation2 + $0x88] sm:$0xff] 0.0
          %273 = vst [vmem:[#allocation2 + $0x90] sm:$0xff] 0.0
          %274 = vst [vmem:[#allocation2 + $0x98] sm:$0xff] 0.0
          %275 = vst [vmem:[#allocation2 + $0xa0] sm:$0xff] 0.0
          %276 = vst [vmem:[#allocation2 + $0xa8] sm:$0xff] 0.0
          %277 = vst [vmem:[#allocation2 + $0xb0] sm:$0xff] 0.0
          %278 = vst [vmem:[#allocation2 + $0xb8] sm:$0xff] 0.0
          %279 = vst [vmem:[#allocation2 + $0xc0] sm:$0xff] 0.0
          %280 = vst [vmem:[#allocation2 + $0xc8] sm:$0xff] 0.0
          %281 = vst [vmem:[#allocation2 + $0xd0] sm:$0xff] 0.0
          %282 = vst [vmem:[#allocation2 + $0xd8] sm:$0xff] 0.0
          %283 = vst [vmem:[#allocation2 + $0xe0] sm:$0xff] 0.0
          %284 = vst [vmem:[#allocation2 + $0xe8] sm:$0xff] 0.0
          %285 = vst [vmem:[#allocation2 + $0xf0] sm:$0xff] 0.0
          %286 = vst [vmem:[#allocation2 + $0xf8] sm:$0xff] 0.0
        $region36: #{tpu_custom_call.1} parent=31 // pred_fallthru
          _
        %v287 = vld [vmem:[#allocation2] sm:$0xff]
        %v288 = vld [vmem:[#allocation2 + $0x8] sm:$0xff]
        %v289 = vld [vmem:[#allocation2 + $0x10] sm:$0xff]
        %v290 = vld [vmem:[#allocation2 + $0x18] sm:$0xff]
        %v291 = vld [vmem:[#allocation2 + $0x20] sm:$0xff]
        %v292 = vld [vmem:[#allocation2 + $0x28] sm:$0xff]
        %v293 = vld [vmem:[#allocation2 + $0x30] sm:$0xff]
        %v294 = vld [vmem:[#allocation2 + $0x38] sm:$0xff]
        %v295 = vld [vmem:[#allocation2 + $0x40] sm:$0xff]
        %v296 = vld [vmem:[#allocation2 + $0x48] sm:$0xff]
        %v297 = vld [vmem:[#allocation2 + $0x50] sm:$0xff]
        %v298 = vld [vmem:[#allocation2 + $0x58] sm:$0xff]
        %v299 = vld [vmem:[#allocation2 + $0x60] sm:$0xff]
        %v300 = vld [vmem:[#allocation2 + $0x68] sm:$0xff]
        %v301 = vld [vmem:[#allocation2 + $0x70] sm:$0xff]
        %v302 = vld [vmem:[#allocation2 + $0x78] sm:$0xff]
        %v303 = vld [vmem:[#allocation2 + $0x80] sm:$0xff]
        %v304 = vld [vmem:[#allocation2 + $0x88] sm:$0xff]
        %v305 = vld [vmem:[#allocation2 + $0x90] sm:$0xff]
        %v306 = vld [vmem:[#allocation2 + $0x98] sm:$0xff]
        %v307 = vld [vmem:[#allocation2 + $0xa0] sm:$0xff]
        %v308 = vld [vmem:[#allocation2 + $0xa8] sm:$0xff]
        %v309 = vld [vmem:[#allocation2 + $0xb0] sm:$0xff]
        %v310 = vld [vmem:[#allocation2 + $0xb8] sm:$0xff]
        %v311 = vld [vmem:[#allocation2 + $0xc0] sm:$0xff]
        %v312 = vld [vmem:[#allocation2 + $0xc8] sm:$0xff]
        %v313 = vld [vmem:[#allocation2 + $0xd0] sm:$0xff]
        %v314 = vld [vmem:[#allocation2 + $0xd8] sm:$0xff]
        %v315 = vld [vmem:[#allocation2 + $0xe0] sm:$0xff]
        %v316 = vld [vmem:[#allocation2 + $0xe8] sm:$0xff]
        %v317 = vld [vmem:[#allocation2 + $0xf0] sm:$0xff]
        %v318 = vld [vmem:[#allocation2 + $0xf8] sm:$0xff]
        %v319 = vld [vmem:[%s236] sm:$0xff]
        %v320 = vld [vmem:[%s236 + $0x8] sm:$0xff]
        %v321 = vld [vmem:[%s236 + $0x10] sm:$0xff]
        %v322 = vld [vmem:[%s236 + $0x18] sm:$0xff]
        %v323 = vld [vmem:[%s236 + $0x20] sm:$0xff]
        %v324 = vld [vmem:[%s236 + $0x28] sm:$0xff]
        %v325 = vld [vmem:[%s236 + $0x30] sm:$0xff]
        %v326 = vld [vmem:[%s236 + $0x38] sm:$0xff]
        %v327 = vld [vmem:[%s236 + $0x40] sm:$0xff]
        %v328 = vld [vmem:[%s236 + $0x48] sm:$0xff]
        %v329 = vld [vmem:[%s236 + $0x50] sm:$0xff]
        %v330 = vld [vmem:[%s236 + $0x58] sm:$0xff]
        %v331 = vld [vmem:[%s236 + $0x60] sm:$0xff]
        %v332 = vld [vmem:[%s236 + $0x68] sm:$0xff]
        %v333 = vld [vmem:[%s236 + $0x70] sm:$0xff]
        %v334 = vld [vmem:[%s236 + $0x78] sm:$0xff]
        %v335 = vld [vmem:[%s236 + $0x80] sm:$0xff]
        %v336 = vld [vmem:[%s236 + $0x88] sm:$0xff]
        %v337 = vld [vmem:[%s236 + $0x90] sm:$0xff]
        %v338 = vld [vmem:[%s236 + $0x98] sm:$0xff]
        %v339 = vld [vmem:[%s236 + $0xa0] sm:$0xff]
        %v340 = vld [vmem:[%s236 + $0xa8] sm:$0xff]
        %v341 = vld [vmem:[%s236 + $0xb0] sm:$0xff]
        %v342 = vld [vmem:[%s236 + $0xb8] sm:$0xff]
        %v343 = vld [vmem:[%s236 + $0xc0] sm:$0xff]
        %v344 = vld [vmem:[%s236 + $0xc8] sm:$0xff]
        %v345 = vld [vmem:[%s236 + $0xd0] sm:$0xff]
        %v346 = vld [vmem:[%s236 + $0xd8] sm:$0xff]
        %v347 = vld [vmem:[%s236 + $0xe0] sm:$0xff]
        %v348 = vld [vmem:[%s236 + $0xe8] sm:$0xff]
        %v349 = vld [vmem:[%s236 + $0xf0] sm:$0xff]
        %v350 = vld [vmem:[%s236 + $0xf8] sm:$0xff]
        %v351 = vld [vmem:[%s245] sm:$0xff]
        %v352 = vld [vmem:[%s245 + $0x8] sm:$0xff]
        %v353 = vld [vmem:[%s245 + $0x10] sm:$0xff]
        %v354 = vld [vmem:[%s245 + $0x18] sm:$0xff]
        %v355 = vld [vmem:[%s245 + $0x20] sm:$0xff]
        %vm356 = vcmask 326656
        %v358 = vsel %vm356, %v319, 0
        %v361 = vsel %vm356, %v320, 0
        %v364 = vsel %vm356, %v321, 0
        %v367 = vsel %vm356, %v322, 0
        %v370 = vsel %vm356, %v323, 0
        %v373 = vsel %vm356, %v324, 0
        %v376 = vsel %vm356, %v325, 0
        %v379 = vsel %vm356, %v326, 0
        %v382 = vsel %vm356, %v327, 0
        %v385 = vsel %vm356, %v328, 0
        %v388 = vsel %vm356, %v329, 0
        %v391 = vsel %vm356, %v330, 0
        %v394 = vsel %vm356, %v331, 0
        %v397 = vsel %vm356, %v332, 0
        %v400 = vsel %vm356, %v333, 0
        %v403 = vsel %vm356, %v334, 0
        %v406 = vsel %vm356, %v335, 0
        %v409 = vsel %vm356, %v336, 0
        %v412 = vsel %vm356, %v337, 0
        %v415 = vsel %vm356, %v338, 0
        %v418 = vsel %vm356, %v339, 0
        %v421 = vsel %vm356, %v340, 0
        %v424 = vsel %vm356, %v341, 0
        %v427 = vsel %vm356, %v342, 0
        %v430 = vsel %vm356, %v343, 0
        %v433 = vsel %vm356, %v344, 0
        %v436 = vsel %vm356, %v345, 0
        %v439 = vsel %vm356, %v346, 0
        %v442 = vsel %vm356, %v347, 0
        %v445 = vsel %vm356, %v348, 0
        %v448 = vsel %vm356, %v349, 0
        %v451 = vsel %vm356, %v350, 0
        %453 = vmatprep.subr.mxu0 0.0
        %454 = vmatpush1.msra.mxu0 0.0
        %455 = vmatprep.subr.mxu0 0.0
        %456 = vmatpush1.msra.mxu0 0.0
        %457 = vmatprep.subr.mxu0 0.0
        %458 = vmatpush1.msra.mxu0 0.0
        %459 = vmatprep.subr.mxu0 0.0
        %460 = vmatpush1.msra.mxu0 0.0
        %461 = vmatprep.subr.mxu0 0.0
        %462 = vmatpush1.msra.mxu0 0.0
        %463 = vmatprep.subr.mxu0 0.0
        %464 = vmatpush1.msra.mxu0 0.0
        %465 = vmatprep.subr.mxu0 0.0
        %466 = vmatpush1.msra.mxu0 0.0
        %467 = vmatprep.subr.mxu0 0.0
        %468 = vmatpush1.msra.mxu0 0.0
        %469 = vmatprep.subr.mxu0 0.0
        %470 = vmatpush1.msra.mxu0 0.0
        %471 = vmatprep.subr.mxu0 0.0
        %472 = vmatpush1.msra.mxu0 0.0
        %473 = vmatprep.subr.mxu0 0.0
        %474 = vmatpush1.msra.mxu0 0.0
        %475 = vmatprep.subr.mxu0 0.0
        %476 = vmatpush1.msra.mxu0 %v355
        %477 = vmatprep.subr.mxu0 0.0
        %478 = vmatpush1.msra.mxu0 %v354
        %479 = vmatprep.subr.mxu0 0.0
        %480 = vmatpush1.msra.mxu0 %v353
        %481 = vmatprep.subr.mxu0 0.0
        %482 = vmatpush1.msra.mxu0 %v352
        %483 = vmatprep.subr.mxu0 0.0
        %484 = vmatpush1.msra.mxu0 %v351
        %485 = vmatprep.subr.mxu0 0.0
        %486 = vmatpush2.msra.mxu0 0.0
        %487 = vmatprep.subr.mxu0 0.0
        %488 = vmatpush2.msra.mxu0 0.0
        %489 = vmatprep.subr.mxu0 0.0
        %490 = vmatpush2.msra.mxu0 0.0
        %491 = vmatprep.subr.mxu0 0.0
        %492 = vmatpush2.msra.mxu0 0.0
        %493 = vmatprep.subr.mxu0 0.0
        %494 = vmatpush2.msra.mxu0 0.0
        %495 = vmatprep.subr.mxu0 0.0
        %496 = vmatpush2.msra.mxu0 0.0
        %497 = vmatprep.subr.mxu0 0.0
        %498 = vmatpush2.msra.mxu0 0.0
        %499 = vmatprep.subr.mxu0 0.0
        %500 = vmatpush2.msra.mxu0 0.0
        %501 = vmatprep.subr.mxu0 0.0
        %502 = vmatpush2.msra.mxu0 0.0
        %503 = vmatprep.subr.mxu0 0.0
        %504 = vmatpush2.msra.mxu0 0.0
        %505 = vmatprep.subr.mxu0 0.0
        %506 = vmatpush2.msra.mxu0 0.0
        %507 = vmatprep.subr.mxu0 0.0
        %508 = vmatpush2.msra.mxu0 0.0
        %509 = vmatprep.subr.mxu0 0.0
        %510 = vmatpush2.msra.mxu0 0.0
        %511 = vmatprep.subr.mxu0 0.0
        %512 = vmatpush2.msra.mxu0 0.0
        %513 = vmatprep.subr.mxu0 0.0
        %514 = vmatpush2.msra.mxu0 0.0
        %515 = vmatprep.subr.mxu0 0.0
        %516 = vmatpush2.msra.mxu0 0.0
        %517 = vmatprep.mubr.f32.mxu0 0.0
        %518 = vmatmul.mubr.f32.gmra.mxu0 %v358
        %v519 = vpop.f32.mrf.mxu0
        %v520 = vadd.f32 0.0, %v519
        %v521 = vpop.f32.mrf.mxu0
        %522 = vmatprep.mubr.f32.mxu0 0.0
        %523 = vmatmul.mubr.f32.gmra.mxu0 %v361
        %v524 = vpop.f32.mrf.mxu0
        %v525 = vadd.f32 0.0, %v524
        %v526 = vpop.f32.mrf.mxu0
        %527 = vmatprep.mubr.f32.mxu0 0.0
        %528 = vmatmul.mubr.f32.gmra.mxu0 %v364
        %v529 = vpop.f32.mrf.mxu0
        %v530 = vadd.f32 0.0, %v529
        %v531 = vpop.f32.mrf.mxu0
        %532 = vmatprep.mubr.f32.mxu0 0.0
        %533 = vmatmul.mubr.f32.gmra.mxu0 %v367
        %v534 = vpop.f32.mrf.mxu0
        %v535 = vadd.f32 0.0, %v534
        %v536 = vpop.f32.mrf.mxu0
        %537 = vmatprep.mubr.f32.mxu0 0.0
        %538 = vmatmul.mubr.f32.gmra.mxu0 %v370
        %v539 = vpop.f32.mrf.mxu0
        %v540 = vadd.f32 0.0, %v539
        %v541 = vpop.f32.mrf.mxu0
        %542 = vmatprep.mubr.f32.mxu0 0.0
        %543 = vmatmul.mubr.f32.gmra.mxu0 %v373
        %v544 = vpop.f32.mrf.mxu0
        %v545 = vadd.f32 0.0, %v544
        %v546 = vpop.f32.mrf.mxu0
        %547 = vmatprep.mubr.f32.mxu0 0.0
        %548 = vmatmul.mubr.f32.gmra.mxu0 %v376
        %v549 = vpop.f32.mrf.mxu0
        %v550 = vadd.f32 0.0, %v549
        %v551 = vpop.f32.mrf.mxu0
        %552 = vmatprep.mubr.f32.mxu0 0.0
        %553 = vmatmul.mubr.f32.gmra.mxu0 %v379
        %v554 = vpop.f32.mrf.mxu0
        %v555 = vadd.f32 0.0, %v554
        %v556 = vpop.f32.mrf.mxu0
        %557 = vmatprep.mubr.f32.mxu0 0.0
        %558 = vmatmul.mubr.f32.gmra.mxu0 %v382
        %v559 = vpop.f32.mrf.mxu0
        %v560 = vadd.f32 0.0, %v559
        %v561 = vpop.f32.mrf.mxu0
        %562 = vmatprep.mubr.f32.mxu0 0.0
        %563 = vmatmul.mubr.f32.gmra.mxu0 %v385
        %v564 = vpop.f32.mrf.mxu0
        %v565 = vadd.f32 0.0, %v564
        %v566 = vpop.f32.mrf.mxu0
        %567 = vmatprep.mubr.f32.mxu0 0.0
        %568 = vmatmul.mubr.f32.gmra.mxu0 %v388
        %v569 = vpop.f32.mrf.mxu0
        %v570 = vadd.f32 0.0, %v569
        %v571 = vpop.f32.mrf.mxu0
        %572 = vmatprep.mubr.f32.mxu0 0.0
        %573 = vmatmul.mubr.f32.gmra.mxu0 %v391
        %v574 = vpop.f32.mrf.mxu0
        %v575 = vadd.f32 0.0, %v574
        %v576 = vpop.f32.mrf.mxu0
        %577 = vmatprep.mubr.f32.mxu0 0.0
        %578 = vmatmul.mubr.f32.gmra.mxu0 %v394
        %v579 = vpop.f32.mrf.mxu0
        %v580 = vadd.f32 0.0, %v579
        %v581 = vpop.f32.mrf.mxu0
        %582 = vmatprep.mubr.f32.mxu0 0.0
        %583 = vmatmul.mubr.f32.gmra.mxu0 %v397
        %v584 = vpop.f32.mrf.mxu0
        %v585 = vadd.f32 0.0, %v584
        %v586 = vpop.f32.mrf.mxu0
        %587 = vmatprep.mubr.f32.mxu0 0.0
        %588 = vmatmul.mubr.f32.gmra.mxu0 %v400
        %v589 = vpop.f32.mrf.mxu0
        %v590 = vadd.f32 0.0, %v589
        %v591 = vpop.f32.mrf.mxu0
        %592 = vmatprep.mubr.f32.mxu0 0.0
        %593 = vmatmul.mubr.f32.gmra.mxu0 %v403
        %v594 = vpop.f32.mrf.mxu0
        %v595 = vadd.f32 0.0, %v594
        %v596 = vpop.f32.mrf.mxu0
        %597 = vmatprep.mubr.f32.mxu0 0.0
        %598 = vmatmul.mubr.f32.gmra.mxu0 %v406
        %v599 = vpop.f32.mrf.mxu0
        %v600 = vadd.f32 0.0, %v599
        %v601 = vpop.f32.mrf.mxu0
        %602 = vmatprep.mubr.f32.mxu0 0.0
        %603 = vmatmul.mubr.f32.gmra.mxu0 %v409
        %v604 = vpop.f32.mrf.mxu0
        %v605 = vadd.f32 0.0, %v604
        %v606 = vpop.f32.mrf.mxu0
        %607 = vmatprep.mubr.f32.mxu0 0.0
        %608 = vmatmul.mubr.f32.gmra.mxu0 %v412
        %v609 = vpop.f32.mrf.mxu0
        %v610 = vadd.f32 0.0, %v609
        %v611 = vpop.f32.mrf.mxu0
        %612 = vmatprep.mubr.f32.mxu0 0.0
        %613 = vmatmul.mubr.f32.gmra.mxu0 %v415
        %v614 = vpop.f32.mrf.mxu0
        %v615 = vadd.f32 0.0, %v614
        %v616 = vpop.f32.mrf.mxu0
        %617 = vmatprep.mubr.f32.mxu0 0.0
        %618 = vmatmul.mubr.f32.gmra.mxu0 %v418
        %v619 = vpop.f32.mrf.mxu0
        %v620 = vadd.f32 0.0, %v619
        %v621 = vpop.f32.mrf.mxu0
        %622 = vmatprep.mubr.f32.mxu0 0.0
        %623 = vmatmul.mubr.f32.gmra.mxu0 %v421
        %v624 = vpop.f32.mrf.mxu0
        %v625 = vadd.f32 0.0, %v624
        %v626 = vpop.f32.mrf.mxu0
        %627 = vmatprep.mubr.f32.mxu0 0.0
        %628 = vmatmul.mubr.f32.gmra.mxu0 %v424
        %v629 = vpop.f32.mrf.mxu0
        %v630 = vadd.f32 0.0, %v629
        %v631 = vpop.f32.mrf.mxu0
        %632 = vmatprep.mubr.f32.mxu0 0.0
        %633 = vmatmul.mubr.f32.gmra.mxu0 %v427
        %v634 = vpop.f32.mrf.mxu0
        %v635 = vadd.f32 0.0, %v634
        %v636 = vpop.f32.mrf.mxu0
        %637 = vmatprep.mubr.f32.mxu0 0.0
        %638 = vmatmul.mubr.f32.gmra.mxu0 %v430
        %v639 = vpop.f32.mrf.mxu0
        %v640 = vadd.f32 0.0, %v639
        %v641 = vpop.f32.mrf.mxu0
        %642 = vmatprep.mubr.f32.mxu0 0.0
        %643 = vmatmul.mubr.f32.gmra.mxu0 %v433
        %v644 = vpop.f32.mrf.mxu0
        %v645 = vadd.f32 0.0, %v644
        %v646 = vpop.f32.mrf.mxu0
        %647 = vmatprep.mubr.f32.mxu0 0.0
        %648 = vmatmul.mubr.f32.gmra.mxu0 %v436
        %v649 = vpop.f32.mrf.mxu0
        %v650 = vadd.f32 0.0, %v649
        %v651 = vpop.f32.mrf.mxu0
        %652 = vmatprep.mubr.f32.mxu0 0.0
        %653 = vmatmul.mubr.f32.gmra.mxu0 %v439
        %v654 = vpop.f32.mrf.mxu0
        %v655 = vadd.f32 0.0, %v654
        %v656 = vpop.f32.mrf.mxu0
        %657 = vmatprep.mubr.f32.mxu0 0.0
        %658 = vmatmul.mubr.f32.gmra.mxu0 %v442
        %v659 = vpop.f32.mrf.mxu0
        %v660 = vadd.f32 0.0, %v659
        %v661 = vpop.f32.mrf.mxu0
        %662 = vmatprep.mubr.f32.mxu0 0.0
        %663 = vmatmul.mubr.f32.gmra.mxu0 %v445
        %v664 = vpop.f32.mrf.mxu0
        %v665 = vadd.f32 0.0, %v664
        %v666 = vpop.f32.mrf.mxu0
        %667 = vmatprep.mubr.f32.mxu0 0.0
        %668 = vmatmul.mubr.f32.gmra.mxu0 %v448
        %v669 = vpop.f32.mrf.mxu0
        %v670 = vadd.f32 0.0, %v669
        %v671 = vpop.f32.mrf.mxu0
        %672 = vmatprep.mubr.f32.mxu0 0.0
        %673 = vmatmul.mubr.f32.gmra.mxu0 %v451
        %v674 = vpop.f32.mrf.mxu0
        %v675 = vadd.f32 0.0, %v674
        %v676 = vpop.f32.mrf.mxu0
        %677 = vdwg.mxu0
        %v678 = vadd.f32 %v287, %v520
        %v679 = vadd.f32 %v288, %v525
        %v680 = vadd.f32 %v289, %v530
        %v681 = vadd.f32 %v290, %v535
        %v682 = vadd.f32 %v291, %v540
        %v683 = vadd.f32 %v292, %v545
        %v684 = vadd.f32 %v293, %v550
        %v685 = vadd.f32 %v294, %v555
        %v686 = vadd.f32 %v295, %v560
        %v687 = vadd.f32 %v296, %v565
        %v688 = vadd.f32 %v297, %v570
        %v689 = vadd.f32 %v298, %v575
        %v690 = vadd.f32 %v299, %v580
        %v691 = vadd.f32 %v300, %v585
        %v692 = vadd.f32 %v301, %v590
        %v693 = vadd.f32 %v302, %v595
        %v694 = vadd.f32 %v303, %v600
        %v695 = vadd.f32 %v304, %v605
        %v696 = vadd.f32 %v305, %v610
        %v697 = vadd.f32 %v306, %v615
        %v698 = vadd.f32 %v307, %v620
        %v699 = vadd.f32 %v308, %v625
        %v700 = vadd.f32 %v309, %v630
        %v701 = vadd.f32 %v310, %v635
        %v702 = vadd.f32 %v311, %v640
        %v703 = vadd.f32 %v312, %v645
        %v704 = vadd.f32 %v313, %v650
        %v705 = vadd.f32 %v314, %v655
        %v706 = vadd.f32 %v315, %v660
        %v707 = vadd.f32 %v316, %v665
        %v708 = vadd.f32 %v317, %v670
        %v709 = vadd.f32 %v318, %v675
        %710 = vst [vmem:[#allocation2] sm:$0xff] %v678
        %711 = vst [vmem:[#allocation2 + $0x8] sm:$0xff] %v679
        %712 = vst [vmem:[#allocation2 + $0x10] sm:$0xff] %v680
        %713 = vst [vmem:[#allocation2 + $0x18] sm:$0xff] %v681
        %714 = vst [vmem:[#allocation2 + $0x20] sm:$0xff] %v682
        %715 = vst [vmem:[#allocation2 + $0x28] sm:$0xff] %v683
        %716 = vst [vmem:[#allocation2 + $0x30] sm:$0xff] %v684
        %717 = vst [vmem:[#allocation2 + $0x38] sm:$0xff] %v685
        %718 = vst [vmem:[#allocation2 + $0x40] sm:$0xff] %v686
        %719 = vst [vmem:[#allocation2 + $0x48] sm:$0xff] %v687
        %720 = vst [vmem:[#allocation2 + $0x50] sm:$0xff] %v688
        %721 = vst [vmem:[#allocation2 + $0x58] sm:$0xff] %v689
        %722 = vst [vmem:[#allocation2 + $0x60] sm:$0xff] %v690
        %723 = vst [vmem:[#allocation2 + $0x68] sm:$0xff] %v691
        %724 = vst [vmem:[#allocation2 + $0x70] sm:$0xff] %v692
        %725 = vst [vmem:[#allocation2 + $0x78] sm:$0xff] %v693
        %726 = vst [vmem:[#allocation2 + $0x80] sm:$0xff] %v694
        %727 = vst [vmem:[#allocation2 + $0x88] sm:$0xff] %v695
        %728 = vst [vmem:[#allocation2 + $0x90] sm:$0xff] %v696
        %729 = vst [vmem:[#allocation2 + $0x98] sm:$0xff] %v697
        %730 = vst [vmem:[#allocation2 + $0xa0] sm:$0xff] %v698
        %731 = vst [vmem:[#allocation2 + $0xa8] sm:$0xff] %v699
        %732 = vst [vmem:[#allocation2 + $0xb0] sm:$0xff] %v700
        %733 = vst [vmem:[#allocation2 + $0xb8] sm:$0xff] %v701
        %734 = vst [vmem:[#allocation2 + $0xc0] sm:$0xff] %v702
        %735 = vst [vmem:[#allocation2 + $0xc8] sm:$0xff] %v703
        %736 = vst [vmem:[#allocation2 + $0xd0] sm:$0xff] %v704
        %737 = vst [vmem:[#allocation2 + $0xd8] sm:$0xff] %v705
        %738 = vst [vmem:[#allocation2 + $0xe0] sm:$0xff] %v706
        %739 = vst [vmem:[#allocation2 + $0xe8] sm:$0xff] %v707
        %740 = vst [vmem:[#allocation2 + $0xf0] sm:$0xff] %v708
        %741 = vst [vmem:[#allocation2 + $0xf8] sm:$0xff] %v709
        // Predicated region
        $region37: #{tpu_custom_call.1} parent=31 // pred_check
          %p742 = pneg %p251
        $region38: #{tpu_custom_call.1} parent=31 // pred_check_branch
          %744 = sbr.rel (%p742) target = $region40
        $region39: #{tpu_custom_call.1} parent=31 // pred_region
          %v745 = vld [vmem:[#allocation2] sm:$0xff]
          %v746 = vld [vmem:[#allocation2 + $0x8] sm:$0xff]
          %v747 = vld [vmem:[#allocation2 + $0x10] sm:$0xff]
          %v748 = vld [vmem:[#allocation2 + $0x18] sm:$0xff]
          %v749 = vld [vmem:[#allocation2 + $0x20] sm:$0xff]
          %v750 = vld [vmem:[#allocation2 + $0x28] sm:$0xff]
          %v751 = vld [vmem:[#allocation2 + $0x30] sm:$0xff]
          %v752 = vld [vmem:[#allocation2 + $0x38] sm:$0xff]
          %v753 = vld [vmem:[#allocation2 + $0x40] sm:$0xff]
          %v754 = vld [vmem:[#allocation2 + $0x48] sm:$0xff]
          %v755 = vld [vmem:[#allocation2 + $0x50] sm:$0xff]
          %v756 = vld [vmem:[#allocation2 + $0x58] sm:$0xff]
          %v757 = vld [vmem:[#allocation2 + $0x60] sm:$0xff]
          %v758 = vld [vmem:[#allocation2 + $0x68] sm:$0xff]
          %v759 = vld [vmem:[#allocation2 + $0x70] sm:$0xff]
          %v760 = vld [vmem:[#allocation2 + $0x78] sm:$0xff]
          %v761 = vld [vmem:[#allocation2 + $0x80] sm:$0xff]
          %v762 = vld [vmem:[#allocation2 + $0x88] sm:$0xff]
          %v763 = vld [vmem:[#allocation2 + $0x90] sm:$0xff]
          %v764 = vld [vmem:[#allocation2 + $0x98] sm:$0xff]
          %v765 = vld [vmem:[#allocation2 + $0xa0] sm:$0xff]
          %v766 = vld [vmem:[#allocation2 + $0xa8] sm:$0xff]
          %v767 = vld [vmem:[#allocation2 + $0xb0] sm:$0xff]
          %v768 = vld [vmem:[#allocation2 + $0xb8] sm:$0xff]
          %v769 = vld [vmem:[#allocation2 + $0xc0] sm:$0xff]
          %v770 = vld [vmem:[#allocation2 + $0xc8] sm:$0xff]
          %v771 = vld [vmem:[#allocation2 + $0xd0] sm:$0xff]
          %v772 = vld [vmem:[#allocation2 + $0xd8] sm:$0xff]
          %v773 = vld [vmem:[#allocation2 + $0xe0] sm:$0xff]
          %v774 = vld [vmem:[#allocation2 + $0xe8] sm:$0xff]
          %v775 = vld [vmem:[#allocation2 + $0xf0] sm:$0xff]
          %v776 = vld [vmem:[#allocation2 + $0xf8] sm:$0xff]
          %v777 = vld [vmem:[%s249] sm:$0x1]
          %v779 = vlaneseq
          %v780 = vshrl.u32 %v779, 7
          %v781 = vsub.s32 0, %v780
          %v782 = vrot.slane %v777, %v781
          %v784 = vadd.f32 %v745, %v782
          %v785 = vadd.f32 %v746, %v782
          %v786 = vadd.f32 %v747, %v782
          %v787 = vadd.f32 %v748, %v782
          %v788 = vadd.f32 %v749, %v782
          %v789 = vadd.f32 %v750, %v782
          %v790 = vadd.f32 %v751, %v782
          %v791 = vadd.f32 %v752, %v782
          %v792 = vadd.f32 %v753, %v782
          %v793 = vadd.f32 %v754, %v782
          %v794 = vadd.f32 %v755, %v782
          %v795 = vadd.f32 %v756, %v782
          %v796 = vadd.f32 %v757, %v782
          %v797 = vadd.f32 %v758, %v782
          %v798 = vadd.f32 %v759, %v782
          %v799 = vadd.f32 %v760, %v782
          %v800 = vadd.f32 %v761, %v782
          %v801 = vadd.f32 %v762, %v782
          %v802 = vadd.f32 %v763, %v782
          %v803 = vadd.f32 %v764, %v782
          %v804 = vadd.f32 %v765, %v782
          %v805 = vadd.f32 %v766, %v782
          %v806 = vadd.f32 %v767, %v782
          %v807 = vadd.f32 %v768, %v782
          %v808 = vadd.f32 %v769, %v782
          %v809 = vadd.f32 %v770, %v782
          %v810 = vadd.f32 %v771, %v782
          %v811 = vadd.f32 %v772, %v782
          %v812 = vadd.f32 %v773, %v782
          %v813 = vadd.f32 %v774, %v782
          %v814 = vadd.f32 %v775, %v782
          %v815 = vadd.f32 %v776, %v782
          %v816 = vxor.u32 %v784, 2147483648
          %v817 = vxor.u32 %v785, 2147483648
          %v818 = vxor.u32 %v786, 2147483648
          %v819 = vxor.u32 %v787, 2147483648
          %v820 = vxor.u32 %v788, 2147483648
          %v821 = vxor.u32 %v789, 2147483648
          %v822 = vxor.u32 %v790, 2147483648
          %v823 = vxor.u32 %v791, 2147483648
          %v824 = vxor.u32 %v792, 2147483648
          %v825 = vxor.u32 %v793, 2147483648
          %v826 = vxor.u32 %v794, 2147483648
          %v827 = vxor.u32 %v795, 2147483648
          %v828 = vxor.u32 %v796, 2147483648
          %v829 = vxor.u32 %v797, 2147483648
          %v830 = vxor.u32 %v798, 2147483648
          %v831 = vxor.u32 %v799, 2147483648
          %v832 = vxor.u32 %v800, 2147483648
          %v833 = vxor.u32 %v801, 2147483648
          %v834 = vxor.u32 %v802, 2147483648
          %v835 = vxor.u32 %v803, 2147483648
          %v836 = vxor.u32 %v804, 2147483648
          %v837 = vxor.u32 %v805, 2147483648
          %v838 = vxor.u32 %v806, 2147483648
          %v839 = vxor.u32 %v807, 2147483648
          %v840 = vxor.u32 %v808, 2147483648
          %v841 = vxor.u32 %v809, 2147483648
          %v842 = vxor.u32 %v810, 2147483648
          %v843 = vxor.u32 %v811, 2147483648
          %v844 = vxor.u32 %v812, 2147483648
          %v845 = vxor.u32 %v813, 2147483648
          %v846 = vxor.u32 %v814, 2147483648
          %v847 = vxor.u32 %v815, 2147483648
          %v848 = vmul.f32 %v816, 1.442695
          %v849 = vpow.pop %v848
          %v850 = vmul.f32 %v817, 1.442695
          %v851 = vpow.pop %v850
          %v852 = vmul.f32 %v818, 1.442695
          %v853 = vpow.pop %v852
          %v854 = vmul.f32 %v819, 1.442695
          %v855 = vpow.pop %v854
          %v856 = vmul.f32 %v820, 1.442695
          %v857 = vpow.pop %v856
          %v858 = vmul.f32 %v821, 1.442695
          %v859 = vpow.pop %v858
          %v860 = vmul.f32 %v822, 1.442695
          %v861 = vpow.pop %v860
          %v862 = vmul.f32 %v823, 1.442695
          %v863 = vpow.pop %v862
          %v864 = vmul.f32 %v824, 1.442695
          %v865 = vpow.pop %v864
          %v866 = vmul.f32 %v825, 1.442695
          %v867 = vpow.pop %v866
          %v868 = vmul.f32 %v826, 1.442695
          %v869 = vpow.pop %v868
          %v870 = vmul.f32 %v827, 1.442695
          %v871 = vpow.pop %v870
          %v872 = vmul.f32 %v828, 1.442695
          %v873 = vpow.pop %v872
          %v874 = vmul.f32 %v829, 1.442695
          %v875 = vpow.pop %v874
          %v876 = vmul.f32 %v830, 1.442695
          %v877 = vpow.pop %v876
          %v878 = vmul.f32 %v831, 1.442695
          %v879 = vpow.pop %v878
          %v880 = vmul.f32 %v832, 1.442695
          %v881 = vpow.pop %v880
          %v882 = vmul.f32 %v833, 1.442695
          %v883 = vpow.pop %v882
          %v884 = vmul.f32 %v834, 1.442695
          %v885 = vpow.pop %v884
          %v886 = vmul.f32 %v835, 1.442695
          %v887 = vpow.pop %v886
          %v888 = vmul.f32 %v836, 1.442695
          %v889 = vpow.pop %v888
          %v890 = vmul.f32 %v837, 1.442695
          %v891 = vpow.pop %v890
          %v892 = vmul.f32 %v838, 1.442695
          %v893 = vpow.pop %v892
          %v894 = vmul.f32 %v839, 1.442695
          %v895 = vpow.pop %v894
          %v896 = vmul.f32 %v840, 1.442695
          %v897 = vpow.pop %v896
          %v898 = vmul.f32 %v841, 1.442695
          %v899 = vpow.pop %v898
          %v900 = vmul.f32 %v842, 1.442695
          %v901 = vpow.pop %v900
          %v902 = vmul.f32 %v843, 1.442695
          %v903 = vpow.pop %v902
          %v904 = vmul.f32 %v844, 1.442695
          %v905 = vpow.pop %v904
          %v906 = vmul.f32 %v845, 1.442695
          %v907 = vpow.pop %v906
          %v908 = vmul.f32 %v846, 1.442695
          %v909 = vpow.pop %v908
          %v910 = vmul.f32 %v847, 1.442695
          %v911 = vpow.pop %v910
          %v912 = vadd.f32 %v849, 1.0
          %v913 = vadd.f32 %v851, 1.0
          %v914 = vadd.f32 %v853, 1.0
          %v915 = vadd.f32 %v855, 1.0
          %v916 = vadd.f32 %v857, 1.0
          %v917 = vadd.f32 %v859, 1.0
          %v918 = vadd.f32 %v861, 1.0
          %v919 = vadd.f32 %v863, 1.0
          %v920 = vadd.f32 %v865, 1.0
          %v921 = vadd.f32 %v867, 1.0
          %v922 = vadd.f32 %v869, 1.0
          %v923 = vadd.f32 %v871, 1.0
          %v924 = vadd.f32 %v873, 1.0
          %v925 = vadd.f32 %v875, 1.0
          %v926 = vadd.f32 %v877, 1.0
          %v927 = vadd.f32 %v879, 1.0
          %v928 = vadd.f32 %v881, 1.0
          %v929 = vadd.f32 %v883, 1.0
          %v930 = vadd.f32 %v885, 1.0
          %v931 = vadd.f32 %v887, 1.0
          %v932 = vadd.f32 %v889, 1.0
          %v933 = vadd.f32 %v891, 1.0
          %v934 = vadd.f32 %v893, 1.0
          %v935 = vadd.f32 %v895, 1.0
          %v936 = vadd.f32 %v897, 1.0
          %v937 = vadd.f32 %v899, 1.0
          %v938 = vadd.f32 %v901, 1.0
          %v939 = vadd.f32 %v903, 1.0
          %v940 = vadd.f32 %v905, 1.0
          %v941 = vadd.f32 %v907, 1.0
          %v942 = vadd.f32 %v909, 1.0
          %v943 = vadd.f32 %v911, 1.0
          %v944 = vrcp.pop %v912
          %v945 = vmul.f32 1.0, %v944
          %v946 = vrcp.pop %v913
          %v947 = vmul.f32 1.0, %v946
          %v948 = vrcp.pop %v914
          %v949 = vmul.f32 1.0, %v948
          %v950 = vrcp.pop %v915
          %v951 = vmul.f32 1.0, %v950
          %v952 = vrcp.pop %v916
          %v953 = vmul.f32 1.0, %v952
          %v954 = vrcp.pop %v917
          %v955 = vmul.f32 1.0, %v954
          %v956 = vrcp.pop %v918
          %v957 = vmul.f32 1.0, %v956
          %v958 = vrcp.pop %v919
          %v959 = vmul.f32 1.0, %v958
          %v960 = vrcp.pop %v920
          %v961 = vmul.f32 1.0, %v960
          %v962 = vrcp.pop %v921
          %v963 = vmul.f32 1.0, %v962
          %v964 = vrcp.pop %v922
          %v965 = vmul.f32 1.0, %v964
          %v966 = vrcp.pop %v923
          %v967 = vmul.f32 1.0, %v966
          %v968 = vrcp.pop %v924
          %v969 = vmul.f32 1.0, %v968
          %v970 = vrcp.pop %v925
          %v971 = vmul.f32 1.0, %v970
          %v972 = vrcp.pop %v926
          %v973 = vmul.f32 1.0, %v972
          %v974 = vrcp.pop %v927
          %v975 = vmul.f32 1.0, %v974
          %v976 = vrcp.pop %v928
          %v977 = vmul.f32 1.0, %v976
          %v978 = vrcp.pop %v929
          %v979 = vmul.f32 1.0, %v978
          %v980 = vrcp.pop %v930
          %v981 = vmul.f32 1.0, %v980
          %v982 = vrcp.pop %v931
          %v983 = vmul.f32 1.0, %v982
          %v984 = vrcp.pop %v932
          %v985 = vmul.f32 1.0, %v984
          %v986 = vrcp.pop %v933
          %v987 = vmul.f32 1.0, %v986
          %v988 = vrcp.pop %v934
          %v989 = vmul.f32 1.0, %v988
          %v990 = vrcp.pop %v935
          %v991 = vmul.f32 1.0, %v990
          %v992 = vrcp.pop %v936
          %v993 = vmul.f32 1.0, %v992
          %v994 = vrcp.pop %v937
          %v995 = vmul.f32 1.0, %v994
          %v996 = vrcp.pop %v938
          %v997 = vmul.f32 1.0, %v996
          %v998 = vrcp.pop %v939
          %v999 = vmul.f32 1.0, %v998
          %v1000 = vrcp.pop %v940
          %v1001 = vmul.f32 1.0, %v1000
          %v1002 = vrcp.pop %v941
          %v1003 = vmul.f32 1.0, %v1002
          %v1004 = vrcp.pop %v942
          %v1005 = vmul.f32 1.0, %v1004
          %v1006 = vrcp.pop %v943
          %v1007 = vmul.f32 1.0, %v1006
          %v1008 = vmul.f32 %v784, %v945
          %v1009 = vmul.f32 %v785, %v947
          %v1010 = vmul.f32 %v786, %v949
          %v1011 = vmul.f32 %v787, %v951
          %v1012 = vmul.f32 %v788, %v953
          %v1013 = vmul.f32 %v789, %v955
          %v1014 = vmul.f32 %v790, %v957
          %v1015 = vmul.f32 %v791, %v959
          %v1016 = vmul.f32 %v792, %v961
          %v1017 = vmul.f32 %v793, %v963
          %v1018 = vmul.f32 %v794, %v965
          %v1019 = vmul.f32 %v795, %v967
          %v1020 = vmul.f32 %v796, %v969
          %v1021 = vmul.f32 %v797, %v971
          %v1022 = vmul.f32 %v798, %v973
          %v1023 = vmul.f32 %v799, %v975
          %v1024 = vmul.f32 %v800, %v977
          %v1025 = vmul.f32 %v801, %v979
          %v1026 = vmul.f32 %v802, %v981
          %v1027 = vmul.f32 %v803, %v983
          %v1028 = vmul.f32 %v804, %v985
          %v1029 = vmul.f32 %v805, %v987
          %v1030 = vmul.f32 %v806, %v989
          %v1031 = vmul.f32 %v807, %v991
          %v1032 = vmul.f32 %v808, %v993
          %v1033 = vmul.f32 %v809, %v995
          %v1034 = vmul.f32 %v810, %v997
          %v1035 = vmul.f32 %v811, %v999
          %v1036 = vmul.f32 %v812, %v1001
          %v1037 = vmul.f32 %v813, %v1003
          %v1038 = vmul.f32 %v814, %v1005
          %v1039 = vmul.f32 %v815, %v1007
          %1040 = vst [vmem:[%s228] sm:$0xff] %v1008
          %1041 = vst [vmem:[%s228 + $0x8] sm:$0xff] %v1009
          %1042 = vst [vmem:[%s228 + $0x10] sm:$0xff] %v1010
          %1043 = vst [vmem:[%s228 + $0x18] sm:$0xff] %v1011
          %1044 = vst [vmem:[%s228 + $0x20] sm:$0xff] %v1012
          %1045 = vst [vmem:[%s228 + $0x28] sm:$0xff] %v1013
          %1046 = vst [vmem:[%s228 + $0x30] sm:$0xff] %v1014
          %1047 = vst [vmem:[%s228 + $0x38] sm:$0xff] %v1015
          %1048 = vst [vmem:[%s228 + $0x40] sm:$0xff] %v1016
          %1049 = vst [vmem:[%s228 + $0x48] sm:$0xff] %v1017
          %1050 = vst [vmem:[%s228 + $0x50] sm:$0xff] %v1018
          %1051 = vst [vmem:[%s228 + $0x58] sm:$0xff] %v1019
          %1052 = vst [vmem:[%s228 + $0x60] sm:$0xff] %v1020
          %1053 = vst [vmem:[%s228 + $0x68] sm:$0xff] %v1021
          %1054 = vst [vmem:[%s228 + $0x70] sm:$0xff] %v1022
          %1055 = vst [vmem:[%s228 + $0x78] sm:$0xff] %v1023
          %1056 = vst [vmem:[%s228 + $0x80] sm:$0xff] %v1024
          %1057 = vst [vmem:[%s228 + $0x88] sm:$0xff] %v1025
          %1058 = vst [vmem:[%s228 + $0x90] sm:$0xff] %v1026
          %1059 = vst [vmem:[%s228 + $0x98] sm:$0xff] %v1027
          %1060 = vst [vmem:[%s228 + $0xa0] sm:$0xff] %v1028
          %1061 = vst [vmem:[%s228 + $0xa8] sm:$0xff] %v1029
          %1062 = vst [vmem:[%s228 + $0xb0] sm:$0xff] %v1030
          %1063 = vst [vmem:[%s228 + $0xb8] sm:$0xff] %v1031
          %1064 = vst [vmem:[%s228 + $0xc0] sm:$0xff] %v1032
          %1065 = vst [vmem:[%s228 + $0xc8] sm:$0xff] %v1033
          %1066 = vst [vmem:[%s228 + $0xd0] sm:$0xff] %v1034
          %1067 = vst [vmem:[%s228 + $0xd8] sm:$0xff] %v1035
          %1068 = vst [vmem:[%s228 + $0xe0] sm:$0xff] %v1036
          %1069 = vst [vmem:[%s228 + $0xe8] sm:$0xff] %v1037
          %1070 = vst [vmem:[%s228 + $0xf0] sm:$0xff] %v1038
          %1071 = vst [vmem:[%s228 + $0xf8] sm:$0xff] %v1039
        $region40: #{tpu_custom_call.1} parent=31 // pred_fallthru
          _
        %s1072 = sand.u32 %s128, 1
        %s1073 = scalar_lea.sflag [#allocation4], %s1072
        %s1074 = sand.u32 %s128, 1
        %s1075 = smul.addr %s1074, 256
        %s1076 = scalar_lea.vmem [#allocation3], %s1075
        // Predicated region
        $region41: #{tpu_custom_call.1} parent=31 // pred_check
          %p1077 = pneg %p138
        $region42: #{tpu_custom_call.1} parent=31 // pred_check_branch
          %1079 = sbr.rel (%p1077) target = $region44
        $region43: #{tpu_custom_call.1} parent=31 // pred_region
          %s1080 = smul.u32 32, %s22
          %s1082 = ssub.s32 4096, 4096
          %1083 = vsyncadd %s1073, %s1082
          %s1084 = sadd.s32 %s23, %s1080
          %s1085 = smul.addr %s1084, 128
          %s1086 = scalar_lea.hbm %s3, %s1085
          %s1087 = sshll.u32 %s1076, 4
          %s1088 = int_to_ptr.vmem [resolvable:$true] %s1087
          %1093 = dma.vmem_to_hbm [thread:$0]  %s1088, 4096, %s1086, %s1073, 128, 128, 8
        $region44: #{tpu_custom_call.1} parent=31 // pred_fallthru
          _
      $region32: #{tpu_custom_call.1} parent=5 // pred_fallthru
        _
      %p1094 = scmp.le.s32.totalorder 2, %s12
      // Predicated region
      $region45: #{tpu_custom_call.1} parent=5 // pred_check
        %p1095 = pneg %p1094
      $region46: #{tpu_custom_call.1} parent=5 // pred_check_branch
        %1097 = sbr.rel (%p1095) target = $region48
      $region47: #{tpu_custom_call.1} parent=5 // pred_region
        %s1098 = ssub.s32 %s12, 2
        // Predicated region
        $region49: #{tpu_custom_call.1} parent=47 // pred_check
          %p1099 = pneg %p144
        $region50: #{tpu_custom_call.1} parent=47 // pred_check_branch
          %1101 = sbr.rel (%p1099) target = $region52
        $region51: #{tpu_custom_call.1} parent=47 // pred_region
          %s1102 = sand.u32 %s129, 1
          %s1103 = scalar_lea.sflag [#allocation4], %s1102
          %s1104 = sand.u32 %s129, 1
          %s1105 = smul.addr %s1104, 256
          %s1106 = scalar_lea.vmem [#allocation3], %s1105
          %1107 = dma.done %s1103, 4096
        $region52: #{tpu_custom_call.1} parent=47 // pred_fallthru
          _
      $region48: #{tpu_custom_call.1} parent=5 // pred_fallthru
        _
    $region6: #{tpu_custom_call.1} parent=1 // loop_footer
      %s16 = sadd.s32 1, %s12
    $region7: #{tpu_custom_call.1} parent=1 // loop_footer_branch
      %11 = sbr.rel target = $region3
    $region8: #{tpu_custom_call.1} parent=1 // loop_exit
      _
    %1108 = vsyncpa [#allocation4], 1
    %s1109 = scalar_lea.sflag [#allocation4], 1
    %1110 = vsyncpa %s1109, 1

</llo_original>
